<compile_context>
chip_gen: v7x
topology: tpu7x:2x2x1
jax: 0.10.0
libtpu: 0.0.40
codegen_flags: <defaults>
</compile_context>

<pallas_src>
import functools

import jax
import jax.numpy as jnp
from jax.experimental import pallas as pl
from jax.experimental.pallas import tpu as pltpu


# Tile caps: comfortably fit double-buffered in v7x's 64 MiB VMEM and give
# full-height MXU passes on every generation.
_TM_CAP = 512     # flattened-row (sublane) tile
_TN_CAP = 512     # output-feature (lane) tile
_TK_CAP = 2048    # contraction tile

_SUBLANE_MULT = {1: 32, 2: 16, 4: 8}   # min sublane granularity per itemsize


def _round_up(v, m):
    return -(-v // m) * m


def _pick_tile(padded, cap, gran=128):
    """Largest multiple of `gran` that divides `padded` and is <= cap."""
    if padded <= cap:
        return padded
    q = padded // gran
    for mult in range(cap // gran, 0, -1):
        if q % mult == 0:
            return mult * gran
    return gran


@functools.lru_cache(maxsize=None)
def _vmem_capacity_bytes():
    try:
        return int(pltpu.get_tpu_info().vmem_capacity_bytes)
    except Exception:
        return 64 << 20          # conservative (v7x) default


# ---------------------------------------------------------------------------
# Kernels
# ---------------------------------------------------------------------------
def _make_single_k_kernel(compute_dtype):
    """Whole contraction in one MXU pass: no accumulator, inline epilogue."""
    def kernel(x_ref, w_ref, b_ref, g_ref, o_ref):
        x = x_ref[...]
        if x.dtype != compute_dtype:
            x = x.astype(compute_dtype)
        y = jnp.dot(x, w_ref[...], preferred_element_type=jnp.float32)
        o_ref[...] = ((y + b_ref[...]) * g_ref[...]).astype(o_ref.dtype)
    return kernel


def _make_multi_k_kernel(compute_dtype):
    """K-tiled contraction with a float32 VMEM accumulator (K innermost)."""
    def kernel(x_ref, w_ref, b_ref, g_ref, o_ref, acc_ref):
        k = pl.program_id(2)

        @pl.when(k == 0)
        def _init():
            acc_ref[...] = jnp.zeros_like(acc_ref)

        x = x_ref[...]
        if x.dtype != compute_dtype:
            x = x.astype(compute_dtype)
        acc_ref[...] += jnp.dot(x, w_ref[...],
                                preferred_element_type=jnp.float32)

        @pl.when(k == pl.num_programs(2) - 1)
        def _finalize():
            o_ref[...] = ((acc_ref[...] + b_ref[...]) * g_ref[...]
                          ).astype(o_ref.dtype)
    return kernel


# ---------------------------------------------------------------------------
# One-time parameter preparation (outside the hot path)
# ---------------------------------------------------------------------------
def prepare_scale_linear_params(w, b, wh, bh, compute_dtype=jnp.bfloat16):
    """Transpose / pad the PyTorch-convention weights once.

    w  : (dim_out, dim_in)    layer weight
    b  : (dim_out,)           layer bias
    wh : (dim_out, 1+dim_c)   hyper weight
    bh : (dim_out,)           hyper bias

    Layer weight -> (dim_in, dim_out), padded to 128-multiples, stored in
    `compute_dtype` (bfloat16 default: native MXU rate, half the weight DMA).
    Bias / hyper params stay float32 (tiny gate matmul + f32 epilogue).
    """
    dim_out, dim_in = w.shape
    ctx_dim = wh.shape[1]
    n_p = _round_up(dim_out, 128)
    k_p = _round_up(dim_in, 128)

    wt = (jnp.zeros((k_p, n_p), compute_dtype)
          .at[:dim_in, :dim_out].set(jnp.transpose(w).astype(compute_dtype)))
    b2 = (jnp.zeros((1, n_p), jnp.float32)
          .at[:, :dim_out].set(b.astype(jnp.float32)))
    wht = (jnp.zeros((ctx_dim, n_p), jnp.float32)
           .at[:, :dim_out].set(jnp.transpose(wh).astype(jnp.float32)))
    bh2 = (jnp.zeros((1, n_p), jnp.float32)
           .at[:, :dim_out].set(bh.astype(jnp.float32)))

    return {"wt": wt, "b": b2, "wht": wht, "bh": bh2,
            "dim_in": dim_in, "dim_out": dim_out}


# ---------------------------------------------------------------------------
# Pallas hot path
# ---------------------------------------------------------------------------
@functools.partial(jax.jit, static_argnames=("dim_in", "dim_out"))
def _scale_linear_pallas(context, x3, wt, b2, wht, bh2, *, dim_in, dim_out):
    B, S, _ = x3.shape
    K_p, N_p = wt.shape
    out_dtype = x3.dtype
    M = B * S

    sub = _SUBLANE_MULT.get(jnp.dtype(out_dtype).itemsize, 8)
    M_p = _round_up(M, sub)

    tm = min(_TM_CAP, M_p)
    tn = _pick_tile(N_p, _TN_CAP)
    tk = _pick_tile(K_p, _TK_CAP)
    nm = pl.cdiv(M_p, tm)
    nn = N_p // tn
    nk = K_p // tk

    # --- Gate hoisted out of the kernel (tiny f32 matmul). -----------------
    gate = jnp.dot(context.astype(jnp.float32), wht,
                   preferred_element_type=jnp.float32) + bh2        # (B, N_p)
    if S > 1:
        # TODO(synk): for very long S, index the (B, N_p) gate per M-tile
        # (requires tm | S_p) instead of materializing one gate row per row.
        gate = jnp.broadcast_to(gate[:, None, :], (B, S, N_p)).reshape(M, N_p)
    if M_p != M:
        gate = jnp.pad(gate, ((0, M_p - M), (0, 0)))

    # --- Flatten (B, S) -> M rows; pad K to the prepared 128-multiple. -----
    x2 = x3.reshape(M, dim_in)
    if M_p != M or K_p != dim_in:
        x2 = jnp.pad(x2, ((0, M_p - M), (0, K_p - dim_in)))

    # --- VMEM budget from the actual (double-buffered) tile sizes. ---------
    it_x = jnp.dtype(x2.dtype).itemsize
    it_w = jnp.dtype(wt.dtype).itemsize
    it_o = jnp.dtype(out_dtype).itemsize
    bufs = 2 * (tm * tk * it_x + tk * tn * it_w + tm * tn * 4
                + tm * tn * it_o + 8 * tn * 4)
    if nk > 1:
        bufs += tm * tn * 4
    vmem_limit = int(min(max(bufs + (8 << 20), 32 << 20),
                         int(0.85 * _vmem_capacity_bytes())))

    cost = pl.CostEstimate(
        flops=int(2 * M_p * K_p * N_p),
        transcendentals=0,
        bytes_accessed=int(nn * M_p * K_p * it_x + nm * K_p * N_p * it_w
                           + M_p * N_p * (4 + it_o)),
    )

    if nk == 1:
        kernel = _make_single_k_kernel(jnp.dtype(wt.dtype))
        grid = (nm, nn)
        in_specs = [
            pl.BlockSpec((tm, K_p), lambda i, j: (i, 0)),   # x rows
            pl.BlockSpec((K_p, tn), lambda i, j: (0, j)),   # weight panel
            pl.BlockSpec((1, tn), lambda i, j: (0, j)),     # bias
            pl.BlockSpec((tm, tn), lambda i, j: (i, j)),    # per-row gate
        ]
        out_spec = pl.BlockSpec((tm, tn), lambda i, j: (i, j))
        scratch = []
        dims = ("parallel", "parallel")
    else:
        kernel = _make_multi_k_kernel(jnp.dtype(wt.dtype))
        grid = (nm, nn, nk)
        in_specs = [
            pl.BlockSpec((tm, tk), lambda i, j, k: (i, k)),
            pl.BlockSpec((tk, tn), lambda i, j, k: (k, j)),
            pl.BlockSpec((1, tn), lambda i, j, k: (0, j)),
            pl.BlockSpec((tm, tn), lambda i, j, k: (i, j)),
        ]
        out_spec = pl.BlockSpec((tm, tn), lambda i, j, k: (i, j))
        scratch = [pltpu.VMEM((tm, tn), jnp.float32)]
        dims = ("parallel", "parallel", "arbitrary")

    out = pl.pallas_call(
        kernel,
        out_shape=jax.ShapeDtypeStruct((M_p, N_p), out_dtype),
        grid=grid,
        in_specs=in_specs,
        out_specs=out_spec,
        scratch_shapes=scratch,
        compiler_params=pltpu.CompilerParams(
            dimension_semantics=dims, vmem_limit_bytes=vmem_limit),
        cost_estimate=cost,
    )(x2, wt, b2, gate)

    if M_p != M or N_p != dim_out:
        out = out[:M, :dim_out]
    return out.reshape(B, S, dim_out)


# ---------------------------------------------------------------------------
# XLA fallback for tiny layers (Pallas launch + 128-padding is pure overhead)
# ---------------------------------------------------------------------------
@functools.partial(jax.jit, static_argnames=("dim_in", "dim_out"))
def _scale_linear_xla(context, x3, wt, b2, wht, bh2, *, dim_in, dim_out):
    gate = jnp.dot(context.astype(jnp.float32), wht,
                   preferred_element_type=jnp.float32) + bh2        # (B, N_p)
    w = wt[:dim_in, :dim_out]
    y = jnp.dot(x3.astype(w.dtype), w, preferred_element_type=jnp.float32)
    y = y + b2[:, :dim_out]
    return (y * gate[:, None, :dim_out]).astype(x3.dtype)


# ---------------------------------------------------------------------------
# Public wrapper
# ---------------------------------------------------------------------------
def scale_linear(context, x, params, *, force_pallas=False):
    """Pallas implementation of ScaleLinear.forward(context, x).

    context : (B, 1 + dim_c)
    x       : (B, S, dim_in) or (B, dim_in)
    params  : output of prepare_scale_linear_params(...)
    """
    dim_in, dim_out = params["dim_in"], params["dim_out"]
    squeeze = x.ndim == 2
    x3 = x[:, None, :] if squeeze else x
    B, S, _ = x3.shape
    M = B * S

    use_pallas = force_pallas or (M >= 256 and dim_in >= 128 and dim_out >= 128)
    fn = _scale_linear_pallas if use_pallas else _scale_linear_xla
    out = fn(context, x3, params["wt"], params["b"], params["wht"],
             params["bh"], dim_in=dim_in, dim_out=dim_out)
    return out[:, 0, :] if squeeze else out


# ---------------------------------------------------------------------------
# Demo / correctness check
# ---------------------------------------------------------------------------
def _init_linear_params(key, dim_out, dim_in, dtype=jnp.float32):
    """PyTorch-style nn.Linear init: U(-1/sqrt(fan_in), +1/sqrt(fan_in))."""
    kw, kb = jax.random.split(key)
    bound = 1.0 / float(dim_in) ** 0.5
    w = jax.random.uniform(kw, (dim_out, dim_in), dtype, -bound, bound)
    b = jax.random.uniform(kb, (dim_out,), dtype, -bound, bound)
    return w, b


if __name__ == "__main__":
    import numpy as np

    def ref_forward(ctx, xv, w, b, wh, bh):
        """float64 numpy reference of the PyTorch forward."""
        gate = ctx @ wh.T + bh
        if xv.ndim == 3:
            gate = gate[:, None, :]
        return (xv @ w.T + b) * gate

    f64 = lambda a: np.asarray(a, dtype=np.float64)

    # Small shapes consistent with the module.
    B, S = 2, 8
    dim_in, dim_out, dim_c = 32, 32, 4
    ctx_dim = 1 + dim_c

    root = jax.random.PRNGKey(0)
    k_ctx, k_x, k_layer, k_hyper = jax.random.split(root, 4)
    context = jax.random.normal(k_ctx, (B, ctx_dim), jnp.float32)
    x = jax.random.normal(k_x, (B, S, dim_in), jnp.float32)
    w, b = _init_linear_params(k_layer, dim_out, dim_in)      # self._layer
    wh, bh = _init_linear_params(k_hyper, dim_out, ctx_dim)   # self._hyper

    ref3 = ref_forward(f64(context), f64(x), f64(w), f64(b), f64(wh), f64(bh))

    # --- default (bfloat16 weights) Pallas path, 3-D x ----------------------
    params = prepare_scale_linear_params(w, b, wh, bh)
    out = jax.block_until_ready(scale_linear(context, x, params, force_pallas=True))
    assert out.shape == (B, S, dim_out)
    assert np.allclose(f64(out), ref3, atol=5e-2, rtol=5e-2)

    # --- 2-D x path (gate not unsqueezed) -----------------------------------
    x2 = x[:, 0, :]
    ref2 = ref_forward(f64(context), f64(x2), f64(w), f64(b), f64(wh), f64(bh))
    out2 = jax.block_until_ready(scale_linear(context, x2, params, force_pallas=True))
    assert out2.shape == (B, dim_out)
    assert np.allclose(f64(out2), ref2, atol=5e-2, rtol=5e-2)

    # --- float32 weights: single-K Pallas path + XLA fallback ---------------
    params_f32 = prepare_scale_linear_params(w, b, wh, bh,
                                             compute_dtype=jnp.float32)
    out_f32 = jax.block_until_ready(
        scale_linear(context, x, params_f32, force_pallas=True))
    assert np.allclose(f64(out_f32), ref3, atol=1.5e-2, rtol=1.5e-2)
    out_fb = jax.block_until_ready(scale_linear(context, x, params_f32))
    assert np.allclose(f64(out_fb), ref3, atol=1.5e-2, rtol=1.5e-2)

    # --- larger shape exercising the multi-K accumulator path ---------------
    Bb, Sb, din_b, dout_b = 2, 64, 4096, 256
    kb = jax.random.split(jax.random.PRNGKey(1), 4)
    ctx_b = jax.random.normal(kb[0], (Bb, ctx_dim), jnp.float32)
    x_b = jax.random.normal(kb[1], (Bb, Sb, din_b), jnp.float32)
    w_b, b_b = _init_linear_params(kb[2], dout_b, din_b)
    wh_b, bh_b = _init_linear_params(kb[3], dout_b, ctx_dim)
    params_b = prepare_scale_linear_params(w_b, b_b, wh_b, bh_b,
                                           compute_dtype=jnp.float32)
    out_b = jax.block_until_ready(
        scale_linear(ctx_b, x_b, params_b, force_pallas=True))
    ref_b = ref_forward(f64(ctx_b), f64(x_b), f64(w_b), f64(b_b),
                        f64(wh_b), f64(bh_b))
    assert out_b.shape == (Bb, Sb, dout_b)
    assert np.allclose(f64(out_b), ref_b, atol=5e-2, rtol=5e-2)

    print("KERNEL_OK")
</pallas_src>

<mosaic_0001>
module attributes {stable_mosaic.version = 11 : i64} {
  func.func @kernel(%arg0: i32, %arg1: i32, %arg2: memref<16x128xf32, #tpu.memory_space<vmem>>, %arg3: memref<128x128xbf16, #tpu.memory_space<vmem>>, %arg4: memref<1x128xf32, #tpu.memory_space<vmem>>, %arg5: memref<16x128xf32, #tpu.memory_space<vmem>>, %arg6: memref<16x128xf32, #tpu.memory_space<vmem>>) attributes {dimension_semantics = [#tpu.dimension_semantics<parallel>, #tpu.dimension_semantics<parallel>], iteration_bounds = array<i64: 1, 1>, scalar_prefetch = 0 : i64, scratch_operands = 0 : i64, tpu.core_type = #tpu.core_type<tc>, window_params = [{transform_indices = @transform_0, window_bounds = array<i64: 16, 128>}, {transform_indices = @transform_1, window_bounds = array<i64: 128, 128>}, {transform_indices = @transform_2, window_bounds = array<i64: 1, 128>}, {transform_indices = @transform_3, window_bounds = array<i64: 16, 128>}, {transform_indices = @transform_4, window_bounds = array<i64: 16, 128>}]} {
    %c0 = arith.constant 0 : index
    %c0_0 = arith.constant 0 : index
    %0 = vector.load %arg2[%c0, %c0_0] : memref<16x128xf32, #tpu.memory_space<vmem>>, vector<16x128xf32>
    %1 = arith.truncf %0 : vector<16x128xf32> to vector<16x128xbf16>
    %c0_1 = arith.constant 0 : index
    %c0_2 = arith.constant 0 : index
    %2 = vector.load %arg3[%c0_1, %c0_2] : memref<128x128xbf16, #tpu.memory_space<vmem>>, vector<128x128xbf16>
    %cst = arith.constant dense<0.000000e+00> : vector<16x128xf32>
    %3 = tpu.matmul %1, %2, %cst {dimension_numbers = #tpu.dot_dimension_numbers<[1], [0], [0], [1], [0, 0, 1, 1], [], []>} : vector<16x128xbf16>, vector<128x128xbf16>, vector<16x128xf32> -> vector<16x128xf32>
    %c0_3 = arith.constant 0 : index
    %c0_4 = arith.constant 0 : index
    %4 = vector.load %arg4[%c0_3, %c0_4] : memref<1x128xf32, #tpu.memory_space<vmem>>, vector<1x128xf32>
    %5 = vector.broadcast %4 : vector<1x128xf32> to vector<16x128xf32>
    %6 = arith.addf %3, %5 : vector<16x128xf32>
    %c0_5 = arith.constant 0 : index
    %c0_6 = arith.constant 0 : index
    %7 = vector.load %arg5[%c0_5, %c0_6] : memref<16x128xf32, #tpu.memory_space<vmem>>, vector<16x128xf32>
    %8 = arith.mulf %6, %7 : vector<16x128xf32>
    %c0_7 = arith.constant 0 : index
    %c0_8 = arith.constant 0 : index
    %9 = vector.load %arg6[%c0_7, %c0_8] : memref<16x128xf32, #tpu.memory_space<vmem>>, vector<16x128xf32>
    tpu.vector_store %arg6[%c0_7, %c0_8], %8 {strides = array<i32>} : memref<16x128xf32, #tpu.memory_space<vmem>>, vector<16x128xf32>,
    return
  }
  func.func @transform_0(%arg0: i32, %arg1: i32) -> (i32, i32) {
    %c0_i32 = arith.constant 0 : i32
    %c0_i32_0 = arith.constant 0 : i32
    return %arg0, %c0_i32 : i32, i32
  }
  func.func @transform_1(%arg0: i32, %arg1: i32) -> (i32, i32) {
    %c0_i32 = arith.constant 0 : i32
    %c0_i32_0 = arith.constant 0 : i32
    return %c0_i32, %arg1 : i32, i32
  }
  func.func @transform_2(%arg0: i32, %arg1: i32) -> (i32, i32) {
    %c0_i32 = arith.constant 0 : i32
    %c0_i32_0 = arith.constant 0 : i32
    return %c0_i32, %arg1 : i32, i32
  }
  func.func @transform_3(%arg0: i32, %arg1: i32) -> (i32, i32) {
    %c0_i32 = arith.constant 0 : i32
    return %arg0, %arg1 : i32, i32
  }
  func.func @transform_4(%arg0: i32, %arg1: i32) -> (i32, i32) {
    %c0_i32 = arith.constant 0 : i32
    return %arg0, %arg1 : i32, i32
  }
}

</mosaic_0001>

<llo_original>
// kernel: _scale_linear_pallas.1
$region0: #{_scale_linear_pallas.1}
  #allocation0 [shape = 'u32[]', space=smem, size = 0x4, offset = 0x4, fixed_abs, tag = 'smem constant byte address 0x4 - core index']
  #allocation1 [shape = 'u32[144,128]{1,0:T(1,128)}', space=vmem, size = 0x12000, scoped, tag = 'internal scratch']
  %s0 = inlined_call_operand.vmem [shape: f32[16,128], index: 0, kind: input, shape index: {}]
  %s1 = inlined_call_operand.vmem [shape: bf16[128,128], index: 1, kind: input, shape index: {}]
  %s2 = inlined_call_operand.vmem [shape: f32[1,128], index: 2, kind: input, shape index: {}]
  %s3 = inlined_call_operand.vmem [shape: f32[16,128], index: 3, kind: input, shape index: {}]
  %s4 = inlined_call_operand.vmem [shape: f32[16,128], index: 4, kind: output, shape index: {}]
  %s5 = sld [smem:[#allocation0]]
  $region26: #{_scale_linear_pallas.1} parent=0
    _
  %s7 = ssub.s32 1, %s5
  %s8 = scalar_select 0, %s7, %s5
  // Predicated region
  $region2: #{_scale_linear_pallas.1} parent=0 // pred_check
    _
  $region3: #{_scale_linear_pallas.1} parent=0 // pred_check_branch
    %10 = sbr.rel (0) target = $region5
  $region4: #{_scale_linear_pallas.1} parent=0 // pred_region
    _
  $region5: #{_scale_linear_pallas.1} parent=0 // pred_fallthru
    _
  // Predicated region
  $region6: #{_scale_linear_pallas.1} parent=0 // pred_check
    _
  $region7: #{_scale_linear_pallas.1} parent=0 // pred_check_branch
    %12 = sbr.rel (0) target = $region9
  $region8: #{_scale_linear_pallas.1} parent=0 // pred_region
    _
  $region9: #{_scale_linear_pallas.1} parent=0 // pred_fallthru
    _
  // Predicated region
  $region10: #{_scale_linear_pallas.1} parent=0 // pred_check
    _
  $region11: #{_scale_linear_pallas.1} parent=0 // pred_check_branch
    %14 = sbr.rel (0) target = $region13
  $region12: #{_scale_linear_pallas.1} parent=0 // pred_region
    _
  $region13: #{_scale_linear_pallas.1} parent=0 // pred_fallthru
    _
  // Predicated region
  $region14: #{_scale_linear_pallas.1} parent=0 // pred_check
    _
  $region15: #{_scale_linear_pallas.1} parent=0 // pred_check_branch
    %16 = sbr.rel (0) target = $region17
  $region16: #{_scale_linear_pallas.1} parent=0 // pred_region
    _
  $region17: #{_scale_linear_pallas.1} parent=0 // pred_fallthru
    _
  %v18 = vld [vmem:[%s0] sm:$0xff]
  %v19 = vld [vmem:[%s0 + $0x8] sm:$0xff]
  %v20 = vpack.c.bf16 %v19, %v18
  %v21 = vld [vmem:[%s1] sm:$0xf]
  %v22 = vld [vmem:[%s1 + $0x4] sm:$0xf]
  %v23 = vld [vmem:[%s1 + $0x8] sm:$0xf]
  %v24 = vld [vmem:[%s1 + $0xc] sm:$0xf]
  %v25 = vld [vmem:[%s1 + $0x10] sm:$0xf]
  %v26 = vld [vmem:[%s1 + $0x14] sm:$0xf]
  %v27 = vld [vmem:[%s1 + $0x18] sm:$0xf]
  %v28 = vld [vmem:[%s1 + $0x1c] sm:$0xf]
  %v29 = vld [vmem:[%s1 + $0x20] sm:$0xf]
  %v30 = vld [vmem:[%s1 + $0x24] sm:$0xf]
  %v31 = vld [vmem:[%s1 + $0x28] sm:$0xf]
  %v32 = vld [vmem:[%s1 + $0x2c] sm:$0xf]
  %v33 = vld [vmem:[%s1 + $0x30] sm:$0xf]
  %v34 = vld [vmem:[%s1 + $0x34] sm:$0xf]
  %v35 = vld [vmem:[%s1 + $0x38] sm:$0xf]
  %v36 = vld [vmem:[%s1 + $0x3c] sm:$0xf]
  %v37 = vld [vmem:[%s2] sm:$0x1]
  %v39 = vlaneseq
  %v40 = vshrl.u32 %v39, 7
  %v41 = vsub.s32 0, %v40
  %v42 = vrot.slane %v37, %v41
  %v60 = vunpack.c.l.b16 %v21
  %v61 = vunpack.c.l.b16 %v22
  %v62 = vunpack.c.l.b16 %v23
  %v63 = vunpack.c.l.b16 %v24
  %v64 = vunpack.c.l.b16 %v25
  %v65 = vunpack.c.l.b16 %v26
  %v66 = vunpack.c.l.b16 %v27
  %v67 = vunpack.c.l.b16 %v28
  %v68 = vunpack.c.l.b16 %v29
  %v69 = vunpack.c.l.b16 %v30
  %v70 = vunpack.c.l.b16 %v31
  %v71 = vunpack.c.l.b16 %v32
  %v72 = vunpack.c.l.b16 %v33
  %v73 = vunpack.c.l.b16 %v34
  %v74 = vunpack.c.l.b16 %v35
  %v75 = vunpack.c.l.b16 %v36
  %v76 = vpack.c.b16 %v61, %v60
  %v77 = vpack.c.b16 %v63, %v62
  %v78 = vpack.c.b16 %v65, %v64
  %v79 = vpack.c.b16 %v67, %v66
  %v80 = vpack.c.b16 %v69, %v68
  %v81 = vpack.c.b16 %v71, %v70
  %v82 = vpack.c.b16 %v73, %v72
  %v83 = vpack.c.b16 %v75, %v74
  %92 = vmatprep.subr.bf16.mxu0 0
  %93 = vmatpush1.bf16.msra.mxu0 %v76
  %94 = vmatprep.subr.bf16.mxu0 0
  %95 = vmatpush1.bf16.msra.mxu0 %v77
  %96 = vmatprep.subr.bf16.mxu0 0
  %97 = vmatpush1.bf16.msra.mxu0 %v78
  %98 = vmatprep.subr.bf16.mxu0 0
  %99 = vmatpush1.bf16.msra.mxu0 %v79
  %100 = vmatprep.subr.bf16.mxu0 0
  %101 = vmatpush1.bf16.msra.mxu0 %v80
  %102 = vmatprep.subr.bf16.mxu0 0
  %103 = vmatpush1.bf16.msra.mxu0 %v81
  %104 = vmatprep.subr.bf16.mxu0 0
  %105 = vmatpush1.bf16.msra.mxu0 %v82
  %106 = vmatprep.subr.bf16.mxu0 0
  %107 = vmatpush1.bf16.msra.mxu0 %v83
  %108 = vmatprep.subr.bf16.mxu0 0
  %109 = vmatpush1.bf16.msra.mxu0 0
  %110 = vmatprep.subr.bf16.mxu0 0
  %111 = vmatpush1.bf16.msra.mxu0 0
  %112 = vmatprep.subr.bf16.mxu0 0
  %113 = vmatpush1.bf16.msra.mxu0 0
  %114 = vmatprep.subr.bf16.mxu0 0
  %115 = vmatpush1.bf16.msra.mxu0 0
  %116 = vmatprep.subr.bf16.mxu0 0
  %117 = vmatpush1.bf16.msra.mxu0 0
  %118 = vmatprep.subr.bf16.mxu0 0
  %119 = vmatpush1.bf16.msra.mxu0 0
  %120 = vmatprep.subr.bf16.mxu0 0
  %121 = vmatpush1.bf16.msra.mxu0 0
  %122 = vmatprep.subr.bf16.mxu0 0
  %123 = vmatpush1.bf16.msra.mxu0 0
  %124 = vmatprep.mubr.bf16.mxu0 0
  %125 = vmatmul.mubr.bf16.gmra.mrb[0].mxu0 %v20
  %v126 = vpop.f32.mrb[0].mxu0
  %v127 = vadd.f32 %v42, %v126
  %v128 = vpop.f32.mrb[0].mxu0
  %v129 = vpop.f32.mrb[0].mxu0
  %v130 = vadd.f32 %v42, %v129
  %v131 = vpop.f32.mrb[0].mxu0
  %132 = vdwg.mxu0
  %v133 = vld [vmem:[%s3] sm:$0xff]
  %v134 = vld [vmem:[%s3 + $0x8] sm:$0xff]
  %v135 = vmul.f32 %v127, %v133
  %v136 = vmul.f32 %v130, %v134
  %137 = vst [vmem:[%s4] sm:$0xff] %v135
  %138 = vst [vmem:[%s4 + $0x8] sm:$0xff] %v136
  // Predicated region
  $region18: #{_scale_linear_pallas.1} parent=0 // pred_check
    _
  $region19: #{_scale_linear_pallas.1} parent=0 // pred_check_branch
    %140 = sbr.rel (0) target = $region21
  $region20: #{_scale_linear_pallas.1} parent=0 // pred_region
    _
  $region21: #{_scale_linear_pallas.1} parent=0 // pred_fallthru
    _
  // Predicated region
  $region22: #{_scale_linear_pallas.1} parent=0 // pred_check
    _
  $region23: #{_scale_linear_pallas.1} parent=0 // pred_check_branch
    %142 = sbr.rel (0) target = $region25
  $region24: #{_scale_linear_pallas.1} parent=0 // pred_region
    _
  $region25: #{_scale_linear_pallas.1} parent=0 // pred_fallthru
    _

</llo_original>
